<compile_context>
chip_gen: v6e
topology: v6e:2x2x1
jax: 0.10.0
libtpu: 0.0.40
codegen_flags: <defaults>
</compile_context>

<pallas_src>
import functools

import jax
import jax.numpy as jnp
from jax.experimental import pallas as pl
from jax.experimental.pallas import tpu as pltpu

IN_F = 2
HID_F = 2
OUT_F = 2


def mlp_kernel(p_ref, x_ref, o_ref):
    """p_ref: (12,) f32 in SMEM.
         p[0:4]  = w1 (out,in) row-major   p[4:6]  = b1
         p[6:10] = w2 (out,in) row-major   p[10:12]= b2
       x_ref: (TILE_B, 2) f32 in VMEM.  o_ref: (TILE_B, 2) f32.
    """
    x = x_ref[...]                      # (TILE_B, 2)
    x0 = x[:, 0:1]                      # (TILE_B, 1)
    x1 = x[:, 1:2]                      # (TILE_B, 1)

    # Layer 1 (PyTorch convention: h_j = sum_i x_i * W[j, i] + b[j]) + tanh.
    h0 = jnp.tanh(x0 * p_ref[0] + x1 * p_ref[1] + p_ref[4])
    h1 = jnp.tanh(x0 * p_ref[2] + x1 * p_ref[3] + p_ref[5])

    # Layer 2.
    y0 = h0 * p_ref[6] + h1 * p_ref[7] + p_ref[10]
    y1 = h0 * p_ref[8] + h1 * p_ref[9] + p_ref[11]

    o_ref[...] = jnp.concatenate([y0, y1], axis=1).astype(o_ref.dtype)


def pack_params(w1, b1, w2, b2):
    """Do this ONCE at parameter setup (not on the per-call hot path)."""
    return jnp.concatenate(
        [w1.reshape(-1), b1.reshape(-1), w2.reshape(-1), b2.reshape(-1)]
    ).astype(jnp.float32)


@functools.partial(jax.jit, static_argnames=())
def mymodel_forward(x, params):
    """x: (B, 2) f32.  params: (12,) f32 from pack_params.  Returns (B, 2) f32."""
    B = x.shape[0]

    # Large row tiles for real batches (~85% of HBM roofline at 512-1024 rows);
    # degenerate single block for tiny batches. Partial final blocks are fine:
    # padded rows compute garbage that is never stored.
    TILE_B = B if B <= 1024 else 1024
    grid = (pl.cdiv(B, TILE_B),)

    return pl.pallas_call(
        mlp_kernel,
        out_shape=jax.ShapeDtypeStruct((B, OUT_F), jnp.float32),
        grid=grid,
        in_specs=[
            # Single packed parameter buffer, resident in SMEM (scalar reads).
            pl.BlockSpec(memory_space=pltpu.MemorySpace.SMEM),
            # Batch-tiled activations.
            pl.BlockSpec((TILE_B, IN_F), lambda i: (i, 0)),
        ],
        out_specs=pl.BlockSpec((TILE_B, OUT_F), lambda i: (i, 0)),
        compiler_params=pltpu.CompilerParams(
            dimension_semantics=("parallel",)),
    )(params, x)


def reference_forward(x, w1, b1, w2, b2):
    h = jnp.tanh(x @ w1.T + b1)
    return h @ w2.T + b2


if __name__ == "__main__":
    key = jax.random.PRNGKey(0)
    k_x, k_w1, k_b1, k_w2, k_b2 = jax.random.split(key, 5)

    batch = 8

    # PyTorch nn.Linear layouts: weight (out, in), bias (out,)
    x  = jax.random.normal(k_x,  (batch, IN_F),   dtype=jnp.float32)
    w1 = jax.random.normal(k_w1, (HID_F, IN_F),   dtype=jnp.float32) * 0.5
    b1 = jax.random.normal(k_b1, (HID_F,),        dtype=jnp.float32) * 0.1
    w2 = jax.random.normal(k_w2, (OUT_F, HID_F),  dtype=jnp.float32) * 0.5
    b2 = jax.random.normal(k_b2, (OUT_F,),        dtype=jnp.float32) * 0.1

    # One-time parameter packing (init-time, not per forward call).
    params = jax.block_until_ready(pack_params(w1, b1, w2, b2))

    out = mymodel_forward(x, params)
    out = jax.block_until_ready(out)

    ref = reference_forward(x, w1, b1, w2, b2)
    assert out.shape == (batch, OUT_F)
    assert jnp.allclose(out, ref, atol=1e-5, rtol=1e-5), "mismatch vs reference"

    print("KERNEL_OK")
</pallas_src>

<mosaic_0001>
module attributes {stable_mosaic.version = 11 : i64} {
  func.func @mlp_kernel(%arg0: i32, %arg1: memref<12xf32, #tpu.memory_space<smem>>, %arg2: memref<8x2xf32, #tpu.memory_space<vmem>>, %arg3: memref<8x2xf32, #tpu.memory_space<vmem>>) attributes {dimension_semantics = [#tpu.dimension_semantics<parallel>], iteration_bounds = array<i64: 1>, scalar_prefetch = 0 : i64, scratch_operands = 0 : i64, tpu.core_type = #tpu.core_type<tc>, window_params = [{transform_indices = @transform_0, window_bounds = array<i64: 12>}, {transform_indices = @transform_1, window_bounds = array<i64: 8, 2>}, {transform_indices = @transform_2, window_bounds = array<i64: 8, 2>}]} {
    %c0 = arith.constant 0 : index
    %c0_0 = arith.constant 0 : index
    %0 = vector.load %arg2[%c0, %c0_0] : memref<8x2xf32, #tpu.memory_space<vmem>>, vector<8x2xf32>
    %1 = vector.extract_strided_slice %0 {offsets = [0, 0], sizes = [8, 1], strides = [1, 1]} : vector<8x2xf32> to vector<8x1xf32>
    %2 = vector.extract_strided_slice %0 {offsets = [0, 1], sizes = [8, 1], strides = [1, 1]} : vector<8x2xf32> to vector<8x1xf32>
    %c0_1 = arith.constant 0 : index
    %3 = memref.load %arg1[%c0_1] : memref<12xf32, #tpu.memory_space<smem>>
    %4 = vector.broadcast %3 : f32 to vector<8x1xf32>
    %5 = arith.mulf %1, %4 : vector<8x1xf32>
    %c1 = arith.constant 1 : index
    %6 = memref.load %arg1[%c1] : memref<12xf32, #tpu.memory_space<smem>>
    %7 = vector.broadcast %6 : f32 to vector<8x1xf32>
    %8 = arith.mulf %2, %7 : vector<8x1xf32>
    %9 = arith.addf %5, %8 : vector<8x1xf32>
    %c4 = arith.constant 4 : index
    %10 = memref.load %arg1[%c4] : memref<12xf32, #tpu.memory_space<smem>>
    %11 = vector.broadcast %10 : f32 to vector<8x1xf32>
    %12 = arith.addf %9, %11 : vector<8x1xf32>
    %13 = math.tanh %12 : vector<8x1xf32>
    %c2 = arith.constant 2 : index
    %14 = memref.load %arg1[%c2] : memref<12xf32, #tpu.memory_space<smem>>
    %15 = vector.broadcast %14 : f32 to vector<8x1xf32>
    %16 = arith.mulf %1, %15 : vector<8x1xf32>
    %c3 = arith.constant 3 : index
    %17 = memref.load %arg1[%c3] : memref<12xf32, #tpu.memory_space<smem>>
    %18 = vector.broadcast %17 : f32 to vector<8x1xf32>
    %19 = arith.mulf %2, %18 : vector<8x1xf32>
    %20 = arith.addf %16, %19 : vector<8x1xf32>
    %c5 = arith.constant 5 : index
    %21 = memref.load %arg1[%c5] : memref<12xf32, #tpu.memory_space<smem>>
    %22 = vector.broadcast %21 : f32 to vector<8x1xf32>
    %23 = arith.addf %20, %22 : vector<8x1xf32>
    %24 = math.tanh %23 : vector<8x1xf32>
    %c6 = arith.constant 6 : index
    %25 = memref.load %arg1[%c6] : memref<12xf32, #tpu.memory_space<smem>>
    %26 = vector.broadcast %25 : f32 to vector<8x1xf32>
    %27 = arith.mulf %13, %26 : vector<8x1xf32>
    %c7 = arith.constant 7 : index
    %28 = memref.load %arg1[%c7] : memref<12xf32, #tpu.memory_space<smem>>
    %29 = vector.broadcast %28 : f32 to vector<8x1xf32>
    %30 = arith.mulf %24, %29 : vector<8x1xf32>
    %31 = arith.addf %27, %30 : vector<8x1xf32>
    %c10 = arith.constant 10 : index
    %32 = memref.load %arg1[%c10] : memref<12xf32, #tpu.memory_space<smem>>
    %33 = vector.broadcast %32 : f32 to vector<8x1xf32>
    %34 = arith.addf %31, %33 : vector<8x1xf32>
    %c8 = arith.constant 8 : index
    %35 = memref.load %arg1[%c8] : memref<12xf32, #tpu.memory_space<smem>>
    %36 = vector.broadcast %35 : f32 to vector<8x1xf32>
    %37 = arith.mulf %13, %36 : vector<8x1xf32>
    %c9 = arith.constant 9 : index
    %38 = memref.load %arg1[%c9] : memref<12xf32, #tpu.memory_space<smem>>
    %39 = vector.broadcast %38 : f32 to vector<8x1xf32>
    %40 = arith.mulf %24, %39 : vector<8x1xf32>
    %41 = arith.addf %37, %40 : vector<8x1xf32>
    %c11 = arith.constant 11 : index
    %42 = memref.load %arg1[%c11] : memref<12xf32, #tpu.memory_space<smem>>
    %43 = vector.broadcast %42 : f32 to vector<8x1xf32>
    %44 = arith.addf %41, %43 : vector<8x1xf32>
    %45 = tpu.concatenate %34, %44 in 1 : vector<8x1xf32>, vector<8x1xf32> -> vector<8x2xf32>
    %c0_2 = arith.constant 0 : index
    %c0_3 = arith.constant 0 : index
    %46 = vector.load %arg3[%c0_2, %c0_3] : memref<8x2xf32, #tpu.memory_space<vmem>>, vector<8x2xf32>
    tpu.vector_store %arg3[%c0_2, %c0_3], %45 {strides = array<i32>} : memref<8x2xf32, #tpu.memory_space<vmem>>, vector<8x2xf32>,
    return
  }
  func.func @transform_0(%arg0: i32) -> i32 {
    %c0_i32 = arith.constant 0 : i32
    %c0_i32_0 = arith.constant 0 : i32
    return %c0_i32 : i32
  }
  func.func @transform_1(%arg0: i32) -> (i32, i32) {
    %c0_i32 = arith.constant 0 : i32
    %c0_i32_0 = arith.constant 0 : i32
    return %arg0, %c0_i32 : i32, i32
  }
  func.func @transform_2(%arg0: i32) -> (i32, i32) {
    %c0_i32 = arith.constant 0 : i32
    %c0_i32_0 = arith.constant 0 : i32
    return %arg0, %c0_i32 : i32, i32
  }
}

</mosaic_0001>

<llo_original>
// kernel: mymodel_forward.1
$region0: #{mymodel_forward.1}
  #allocation0 [shape = 'u32[]', space=smem, size = 0x4, offset = 0x4, fixed_abs, tag = 'smem constant byte address 0x4 - core index']
  #allocation1 [shape = 'u32[144,128]{1,0:T(1,128)}', space=vmem, size = 0x12000, scoped, tag = 'internal scratch']
  %s0 = inlined_call_operand.vmem [shape: f32[12], index: 0, kind: input, shape index: {}]
  %s1 = inlined_call_operand.vmem [shape: f32[8,2], index: 1, kind: input, shape index: {}]
  %s2 = inlined_call_operand.vmem [shape: f32[8,2], index: 2, kind: output, shape index: {}]
  %s3 = sld [smem:[#allocation0]]
  $region22: #{mymodel_forward.1} parent=0
    _
  %s5 = ssub.s32 1, %s3
  %s6 = scalar_select 0, %s5, %s3
  $region1: #{mymodel_forward.1} parent=0
    #allocation2 [shape = 'u8[512]{0}', space=smem, size = 0x200, scoped, tag = 'input window, operand 0, single buffered']
    #allocation3 [shape = 's32[1]{0}', space=sflag, size = 0x4, scoped, tag = 'scoped memory for mymodel_forward.1']
    %7 = vsyncpa [#allocation3], 0
    // Predicated region
    $region2: #{mymodel_forward.1} parent=1 // pred_check
      _
    $region3: #{mymodel_forward.1} parent=1 // pred_check_branch
      %9 = sbr.rel (0) target = $region5
    $region4: #{mymodel_forward.1} parent=1 // pred_region
      %s11 = ssub.s32 16, 16
      %12 = vsyncadd [#allocation3], %s11
      %s14 = sshll.u32 %s0, 4
      %s15 = int_to_ptr.vmem [resolvable:$true] %s14
      %17 = dma.vmem_to_smem %s15, 16, [#allocation2], [#allocation3]
    $region5: #{mymodel_forward.1} parent=1 // pred_fallthru
      _
    // Predicated region
    $region6: #{mymodel_forward.1} parent=1 // pred_check
      _
    $region7: #{mymodel_forward.1} parent=1 // pred_check_branch
      %19 = sbr.rel (0) target = $region9
    $region8: #{mymodel_forward.1} parent=1 // pred_region
      _
    $region9: #{mymodel_forward.1} parent=1 // pred_fallthru
      _
    // Predicated region
    $region10: #{mymodel_forward.1} parent=1 // pred_check
      _
    $region11: #{mymodel_forward.1} parent=1 // pred_check_branch
      %21 = sbr.rel (0) target = $region13
    $region12: #{mymodel_forward.1} parent=1 // pred_region
      %22 = dma.done [#allocation3], 16
    $region13: #{mymodel_forward.1} parent=1 // pred_fallthru
      _
    %23 = sfence
    %v24 = vld [vmem:[%s1] sm:$0xff]
    %s25 = sld [smem:[#allocation2]]
    %v26 = vstv %s25
    %v27 = vmul.f32 %v24, %v26
    %s28 = sld [smem:[#allocation2 + $0x1]]
    %v29 = vstv %s28
    %v30 = vmul.f32 %v24, %v29
    %32 = vrot.lane.b32.xlu0 %v30, 127
    %v33 = vpop.permute.xlu0 %32
    %v35 = vadd.f32 %v27, %v33
    %s36 = sld [smem:[#allocation2 + $0x4]]
    %v37 = vstv %s36
    %v38 = vadd.f32 %v35, %v37
    %v39 = vtanh.pop %v38
    %s40 = sld [smem:[#allocation2 + $0x2]]
    %v41 = vstv %s40
    %v42 = vmul.f32 %v24, %v41
    %s43 = sld [smem:[#allocation2 + $0x3]]
    %v44 = vstv %s43
    %v45 = vmul.f32 %v24, %v44
    %47 = vrot.lane.b32.xlu0 %v45, 127
    %v48 = vpop.permute.xlu0 %47
    %v50 = vadd.f32 %v42, %v48
    %s51 = sld [smem:[#allocation2 + $0x5]]
    %v52 = vstv %s51
    %v53 = vadd.f32 %v50, %v52
    %v54 = vtanh.pop %v53
    %s55 = sld [smem:[#allocation2 + $0x6]]
    %v56 = vstv %s55
    %v57 = vmul.f32 %v39, %v56
    %s58 = sld [smem:[#allocation2 + $0x7]]
    %v59 = vstv %s58
    %v60 = vmul.f32 %v54, %v59
    %v61 = vadd.f32 %v57, %v60
    %s62 = sld [smem:[#allocation2 + $0xa]]
    %v63 = vstv %s62
    %v64 = vadd.f32 %v61, %v63
    %s65 = sld [smem:[#allocation2 + $0x8]]
    %v66 = vstv %s65
    %v67 = vmul.f32 %v39, %v66
    %s68 = sld [smem:[#allocation2 + $0x9]]
    %v69 = vstv %s68
    %v70 = vmul.f32 %v54, %v69
    %v71 = vadd.f32 %v67, %v70
    %s72 = sld [smem:[#allocation2 + $0xb]]
    %v73 = vstv %s72
    %v74 = vadd.f32 %v71, %v73
    %76 = vrot.lane.b32.xlu0 %v74, 1
    %v77 = vpop.permute.xlu0 %76
    %vm79 = vcmask 7168
    %v80 = vsel %vm79, %v64, %v77
    %vm81 = vcmask 15360
    %82 = vst.msk [vmem:[%s2] sm:$0xff] %vm81, %v80
    // Predicated region
    $region14: #{mymodel_forward.1} parent=1 // pred_check
      _
    $region15: #{mymodel_forward.1} parent=1 // pred_check_branch
      %84 = sbr.rel (0) target = $region17
    $region16: #{mymodel_forward.1} parent=1 // pred_region
      _
    $region17: #{mymodel_forward.1} parent=1 // pred_fallthru
      _
    // Predicated region
    $region18: #{mymodel_forward.1} parent=1 // pred_check
      _
    $region19: #{mymodel_forward.1} parent=1 // pred_check_branch
      %86 = sbr.rel (0) target = $region21
    $region20: #{mymodel_forward.1} parent=1 // pred_region
      _
    $region21: #{mymodel_forward.1} parent=1 // pred_fallthru
      _
    %87 = vsyncpa [#allocation3], 1

</llo_original>
